<compile_context>
chip_gen: v6e
topology: v6e:2x2x1
jax: 0.10.0
libtpu: 0.0.40
codegen_flags: <defaults>
</compile_context>

<pallas_src>
import functools

import jax
import jax.numpy as jnp
from jax.experimental import pallas as pl
from jax.experimental.pallas import tpu as pltpu


def _head_kernel(x_ref, w_ref, o_ref):
    # x_ref: [TM, K]   w_ref: [K, TN]   o_ref: [TM, TN]
    o_ref[...] = jnp.dot(
        x_ref[...], w_ref[...], preferred_element_type=jnp.float32
    ).astype(o_ref.dtype)


def _vmem_budget_bytes():
    """Per-TensorCore VMEM budget: physical capacity minus headroom for Mosaic scratch."""
    try:
        cap = int(pltpu.get_tpu_info().vmem_capacity_bytes)
    except Exception:
        cap = 64 << 20  # conservative fallback (v7x per-TC capacity)
    # ~1/8 headroom: 128 MiB -> 112 MiB (v5e/v6e), 64 MiB -> 56 MiB (v7x).
    return max(32 << 20, cap - max(8 << 20, cap // 8))


@functools.partial(jax.jit, static_argnames=("tm", "tn", "compute_dtype"))
def gpt4ehr_head_forward(
    hidden_state, model_embeddings_weights, *, tm=256, tn=2048, compute_dtype=None
):
    """hidden_state: [B, T, d_in]; model_embeddings_weights: [d_in, d_out] -> [B, T, d_out].

    Matches GPT4EHRHead.forward: code_logits = hidden_state @ model_embeddings_weights.
    """
    assert tm % 8 == 0, "tm must be sublane-aligned (multiple of 8)"
    assert tn % 128 == 0, "tn must be lane-aligned (multiple of 128)"

    B, T, d_in = hidden_state.shape
    d_in_w, d_out = model_embeddings_weights.shape
    assert d_in == d_in_w, "hidden dim must match embedding dim"
    M = B * T
    out_dtype = hidden_state.dtype

    x2d = hidden_state.reshape(M, d_in)
    w = model_embeddings_weights
    if compute_dtype is not None:
        # Optional bf16 compute path: halves HBM traffic, native MXU rate;
        # accumulation stays f32 and the output keeps hidden_state's dtype.
        x2d = x2d.astype(compute_dtype)
        w = w.astype(compute_dtype)

    x_isz = jnp.dtype(x2d.dtype).itemsize
    w_isz = jnp.dtype(w.dtype).itemsize
    o_isz = jnp.dtype(out_dtype).itemsize

    # Tile sizes: full-dim exemption when the array is smaller than the tile;
    # otherwise aligned tiles with ragged (masked) last blocks via pl.cdiv.
    TM = tm if M >= tm else M
    TN = tn if d_out >= tn else d_out

    budget = _vmem_budget_bytes()

    def footprint(tm_, tn_):
        return (
            2 * tm_ * d_in * x_isz      # activation tile, double-buffered
            + 1 * d_in * tn_ * w_isz    # weight tile, single-buffered (Buffered(1))
            + 2 * tm_ * tn_ * o_isz     # output tile, double-buffered
        )

    # Auto-shrink (TN first, then TM) until the tiles fit this chip's VMEM.
    while footprint(TM, TN) > budget and TN > 512 and TN % 256 == 0:
        TN //= 2
    while footprint(TM, TN) > budget and TM > 64 and TM % 16 == 0:
        TM //= 2
    fp = footprint(TM, TN)
    # TODO(synk): for f32 inputs with very large d_in (>~8K) even the minimal
    # K-whole tile can exceed a v7x TensorCore's 64 MiB VMEM; add a K grid axis
    # ("arbitrary") with an f32 accumulator scratch, or pass compute_dtype=bf16.

    n_n = pl.cdiv(d_out, TN)
    n_m = pl.cdiv(M, TM)
    grid = (n_n, n_m)  # N outer / M inner: weight tile resident across the M sweep.

    vmem_limit = int(min(budget, max(fp + (4 << 20), 32 << 20)))

    cost = pl.CostEstimate(
        flops=2 * M * d_in * d_out,
        transcendentals=0,
        bytes_accessed=(
            n_n * M * d_in * x_isz      # activation re-read once per outer N tile
            + d_in * d_out * w_isz      # embedding matrix read once
            + M * d_out * o_isz         # logits written once
        ),
    )

    out = pl.pallas_call(
        _head_kernel,
        out_shape=jax.ShapeDtypeStruct((M, d_out), out_dtype),
        grid_spec=pltpu.PrefetchScalarGridSpec(
            num_scalar_prefetch=0,
            grid=grid,
            in_specs=[
                # Token tile: streams over M (inner axis), K kept whole.
                pl.BlockSpec((TM, d_in), lambda j, i: (i, 0)),
                # Weight tile: constant over the M sweep -> VMEM-resident;
                # single-buffered so the saved buffer pays for a larger TN.
                pl.BlockSpec(
                    (d_in, TN),
                    lambda j, i: (0, j),
                    pipeline_mode=pl.Buffered(1),
                ),
            ],
            out_specs=pl.BlockSpec((TM, TN), lambda j, i: (i, j)),
        ),
        compiler_params=pltpu.CompilerParams(
            dimension_semantics=("parallel", "parallel"),
            vmem_limit_bytes=vmem_limit,
        ),
        cost_estimate=cost,
    )(x2d, w)

    return out.reshape(B, T, d_out)


def _reference(hidden_state, model_embeddings_weights):
    # nn.Linear(d_in, d_out, bias=False) with weight = E.T  ->  h @ E
    return jnp.einsum("btd,dv->btv", hidden_state, model_embeddings_weights)


if __name__ == "__main__":
    # Small shapes consistent with the module: n_embd = 32, vocab = 160.
    B, T, n_embd, vocab = 2, 8, 32, 160

    key = jax.random.PRNGKey(0)
    kh, ke = jax.random.split(key)
    hidden = jax.random.normal(kh, (B, T, n_embd), dtype=jnp.float32)
    # Tied embedding weights, mirroring nn.init.normal_(std=0.02).
    emb = 0.02 * jax.random.normal(ke, (n_embd, vocab), dtype=jnp.float32)

    ref = _reference(hidden, emb)

    # Default tiles: single block at these toy shapes (TM=M, TN=d_out).
    out = gpt4ehr_head_forward(hidden, emb)
    jax.block_until_ready(out)
    assert out.shape == (B, T, vocab)
    assert jnp.allclose(out, ref, atol=1e-5, rtol=1e-5), "mismatch vs reference"

    # Small explicit tiles: multi-step grid with a ragged N edge (160 = 128 + 32),
    # exercising the index maps and Pallas boundary masking (no wrapper padding).
    out_tiled = gpt4ehr_head_forward(hidden, emb, tm=8, tn=128)
    jax.block_until_ready(out_tiled)
    assert jnp.allclose(out_tiled, ref, atol=1e-5, rtol=1e-5), "tiled mismatch vs reference"

    # bf16 compute path (f32 accumulate, f32 logits) — the recommended config on
    # real vocab heads; looser tolerance reflects the bf16 input rounding.
    out_bf16 = gpt4ehr_head_forward(hidden, emb, compute_dtype=jnp.bfloat16)
    jax.block_until_ready(out_bf16)
    assert jnp.allclose(out_bf16, ref, atol=5e-2, rtol=5e-2), "bf16 mismatch vs reference"

    print("KERNEL_OK")
</pallas_src>

<mosaic_0001>
module attributes {stable_mosaic.version = 11 : i64} {
  func.func @_head_kernel(%arg0: i32, %arg1: i32, %arg2: memref<16x32xf32, #tpu.memory_space<vmem>>, %arg3: memref<32x160xf32, #tpu.memory_space<vmem>>, %arg4: memref<16x160xf32, #tpu.memory_space<vmem>>) attributes {dimension_semantics = [#tpu.dimension_semantics<parallel>, #tpu.dimension_semantics<parallel>], iteration_bounds = array<i64: 1, 1>, scalar_prefetch = 0 : i64, scratch_operands = 0 : i64, tpu.core_type = #tpu.core_type<tc>, window_params = [{transform_indices = @transform_0, window_bounds = array<i64: 16, 32>}, {pipeline_mode = #tpu.pipeline_mode<synchronous>, transform_indices = @transform_1, window_bounds = array<i64: 32, 160>}, {transform_indices = @transform_2, window_bounds = array<i64: 16, 160>}]} {
    %c0 = arith.constant 0 : index
    %c0_0 = arith.constant 0 : index
    %0 = vector.load %arg2[%c0, %c0_0] : memref<16x32xf32, #tpu.memory_space<vmem>>, vector<16x32xf32>
    %c0_1 = arith.constant 0 : index
    %c0_2 = arith.constant 0 : index
    %1 = vector.load %arg3[%c0_1, %c0_2] : memref<32x160xf32, #tpu.memory_space<vmem>>, vector<32x160xf32>
    %cst = arith.constant dense<0.000000e+00> : vector<16x160xf32>
    %2 = tpu.matmul %0, %1, %cst {dimension_numbers = #tpu.dot_dimension_numbers<[1], [0], [0], [1], [0, 0, 1, 1], [], []>} : vector<16x32xf32>, vector<32x160xf32>, vector<16x160xf32> -> vector<16x160xf32>
    %c0_3 = arith.constant 0 : index
    %c0_4 = arith.constant 0 : index
    %3 = vector.load %arg4[%c0_3, %c0_4] : memref<16x160xf32, #tpu.memory_space<vmem>>, vector<16x160xf32>
    tpu.vector_store %arg4[%c0_3, %c0_4], %2 {strides = array<i32>} : memref<16x160xf32, #tpu.memory_space<vmem>>, vector<16x160xf32>,
    return
  }
  func.func @transform_0(%arg0: i32, %arg1: i32) -> (i32, i32) {
    %c0_i32 = arith.constant 0 : i32
    %c0_i32_0 = arith.constant 0 : i32
    return %arg1, %c0_i32 : i32, i32
  }
  func.func @transform_1(%arg0: i32, %arg1: i32) -> (i32, i32) {
    %c0_i32 = arith.constant 0 : i32
    %c0_i32_0 = arith.constant 0 : i32
    return %c0_i32, %arg0 : i32, i32
  }
  func.func @transform_2(%arg0: i32, %arg1: i32) -> (i32, i32) {
    %c0_i32 = arith.constant 0 : i32
    return %arg1, %arg0 : i32, i32
  }
}

</mosaic_0001>

<llo_original>
// kernel: gpt4ehr_head_forward.1
$region0: #{gpt4ehr_head_forward.1}
  #allocation0 [shape = 'u32[]', space=smem, size = 0x4, offset = 0x4, fixed_abs, tag = 'smem constant byte address 0x4 - core index']
  #allocation1 [shape = 'u32[144,128]{1,0:T(1,128)}', space=vmem, size = 0x12000, scoped, tag = 'internal scratch']
  %s0 = inlined_call_operand.hbm [shape: f32[16,32], index: 0, kind: input, shape index: {}]
  %s1 = inlined_call_operand.hbm [shape: f32[32,160], index: 1, kind: input, shape index: {}]
  %s2 = inlined_call_operand.hbm [shape: f32[16,160], index: 2, kind: output, shape index: {}]
  %s3 = sld [smem:[#allocation0]]
  $region26: #{gpt4ehr_head_forward.1} parent=0
    _
  %s5 = ssub.s32 1, %s3
  %s6 = scalar_select 0, %s5, %s3
  $region1: #{gpt4ehr_head_forward.1} parent=0
    #allocation2 [shape = 'u8[8192]{0}', space=vmem, size = 0x2000, scoped, tag = 'input window, operand 0, single buffered']
    #allocation3 [shape = 's32[1]{0}', space=sflag, size = 0x4, scoped, tag = 'scoped memory for gpt4ehr_head_forward.1']
    #allocation4 [shape = 's32[1]{0}', space=sflag, size = 0x4, scoped, tag = 'scoped memory for gpt4ehr_head_forward.1']
    #allocation5 [shape = 'u8[32768]{0}', space=vmem, size = 0x8000, scoped, tag = 'input window, operand 1, single buffered']
    #allocation6 [shape = 's32[1]{0}', space=sflag, size = 0x4, scoped, tag = 'scoped memory for gpt4ehr_head_forward.1']
    #allocation7 [shape = 'u8[16384]{0}', space=vmem, size = 0x4000, scoped, tag = 'output window, operand 0, single buffered']
    %7 = vsyncpa [#allocation3], 0
    %8 = vsyncpa [#allocation6], 0
    %9 = vsyncpa [#allocation4], 0
    // Predicated region
    $region2: #{gpt4ehr_head_forward.1} parent=1 // pred_check
      _
    $region3: #{gpt4ehr_head_forward.1} parent=1 // pred_check_branch
      %11 = sbr.rel (0) target = $region5
    $region4: #{gpt4ehr_head_forward.1} parent=1 // pred_region
      %s13 = ssub.s32 256, 256
      %14 = vsyncadd [#allocation3], %s13
      %s15 = sshll.u32 [#allocation2], 4
      %s16 = int_to_ptr.vmem [resolvable:$true] %s15
      %21 = dma.hbm_to_vmem [thread:$0]  %s0, 256, %s16, [#allocation3], 128, 128, 8
    $region5: #{gpt4ehr_head_forward.1} parent=1 // pred_fallthru
      _
    // Predicated region
    $region6: #{gpt4ehr_head_forward.1} parent=1 // pred_check
      _
    $region7: #{gpt4ehr_head_forward.1} parent=1 // pred_check_branch
      %23 = sbr.rel (0) target = $region9
    $region8: #{gpt4ehr_head_forward.1} parent=1 // pred_region
      %s25 = ssub.s32 1024, 1024
      %26 = vsyncadd [#allocation6], %s25
      %s27 = sshll.u32 [#allocation5], 4
      %s28 = int_to_ptr.vmem [resolvable:$true] %s27
      %33 = dma.hbm_to_vmem [thread:$0]  %s1, 1024, %s28, [#allocation6], 256, 256, 16
    $region9: #{gpt4ehr_head_forward.1} parent=1 // pred_fallthru
      _
    // Predicated region
    $region10: #{gpt4ehr_head_forward.1} parent=1 // pred_check
      _
    $region11: #{gpt4ehr_head_forward.1} parent=1 // pred_check_branch
      %35 = sbr.rel (0) target = $region13
    $region12: #{gpt4ehr_head_forward.1} parent=1 // pred_region
      %36 = dma.done [#allocation3], 256
    $region13: #{gpt4ehr_head_forward.1} parent=1 // pred_fallthru
      _
    // Predicated region
    $region14: #{gpt4ehr_head_forward.1} parent=1 // pred_check
      _
    $region15: #{gpt4ehr_head_forward.1} parent=1 // pred_check_branch
      %38 = sbr.rel (0) target = $region17
    $region16: #{gpt4ehr_head_forward.1} parent=1 // pred_region
      %39 = dma.done [#allocation6], 1024
    $region17: #{gpt4ehr_head_forward.1} parent=1 // pred_fallthru
      _
    %v40 = vld [vmem:[#allocation2] sm:$0xff]
    %v41 = vld [vmem:[#allocation2 + $0x8] sm:$0xff]
    %v42 = vld [vmem:[#allocation5] sm:$0xff]
    %v43 = vld [vmem:[#allocation5 + $0x8] sm:$0xff]
    %v44 = vld [vmem:[#allocation5 + $0x10] sm:$0xff]
    %v45 = vld [vmem:[#allocation5 + $0x18] sm:$0xff]
    %v46 = vld [vmem:[#allocation5 + $0x20] sm:$0xff]
    %v47 = vld [vmem:[#allocation5 + $0x28] sm:$0xff]
    %v48 = vld [vmem:[#allocation5 + $0x30] sm:$0xff]
    %v49 = vld [vmem:[#allocation5 + $0x38] sm:$0xff]
    %vm50 = vcmask 261120
    %v52 = vsel %vm50, %v40, 0
    %v55 = vsel %vm50, %v41, 0
    %57 = vmatprep.subr.mxu0 0.0
    %58 = vmatpush1.msra.mxu0 0.0
    %59 = vmatprep.subr.mxu0 0.0
    %60 = vmatpush1.msra.mxu0 0.0
    %61 = vmatprep.subr.mxu0 0.0
    %62 = vmatpush1.msra.mxu0 0.0
    %63 = vmatprep.subr.mxu0 0.0
    %64 = vmatpush1.msra.mxu0 0.0
    %65 = vmatprep.subr.mxu0 0.0
    %66 = vmatpush1.msra.mxu0 0.0
    %67 = vmatprep.subr.mxu0 0.0
    %68 = vmatpush1.msra.mxu0 0.0
    %69 = vmatprep.subr.mxu0 0.0
    %70 = vmatpush1.msra.mxu0 0.0
    %71 = vmatprep.subr.mxu0 0.0
    %72 = vmatpush1.msra.mxu0 0.0
    %73 = vmatprep.subr.mxu0 0.0
    %74 = vmatpush1.msra.mxu0 0.0
    %75 = vmatprep.subr.mxu0 0.0
    %76 = vmatpush1.msra.mxu0 0.0
    %77 = vmatprep.subr.mxu0 0.0
    %78 = vmatpush1.msra.mxu0 0.0
    %79 = vmatprep.subr.mxu0 0.0
    %80 = vmatpush1.msra.mxu0 0.0
    %81 = vmatprep.subr.mxu0 %v49
    %82 = vmatpush1.msra.mxu0 %v48
    %83 = vmatprep.subr.mxu0 %v47
    %84 = vmatpush1.msra.mxu0 %v46
    %85 = vmatprep.subr.mxu0 %v45
    %86 = vmatpush1.msra.mxu0 %v44
    %87 = vmatprep.subr.mxu0 %v43
    %88 = vmatpush1.msra.mxu0 %v42
    %89 = vmatprep.subr.mxu0 0.0
    %90 = vmatpush2.msra.mxu0 0.0
    %91 = vmatprep.subr.mxu0 0.0
    %92 = vmatpush2.msra.mxu0 0.0
    %93 = vmatprep.subr.mxu0 0.0
    %94 = vmatpush2.msra.mxu0 0.0
    %95 = vmatprep.subr.mxu0 0.0
    %96 = vmatpush2.msra.mxu0 0.0
    %97 = vmatprep.subr.mxu0 0.0
    %98 = vmatpush2.msra.mxu0 0.0
    %99 = vmatprep.subr.mxu0 0.0
    %100 = vmatpush2.msra.mxu0 0.0
    %101 = vmatprep.subr.mxu0 0.0
    %102 = vmatpush2.msra.mxu0 0.0
    %103 = vmatprep.subr.mxu0 0.0
    %104 = vmatpush2.msra.mxu0 0.0
    %105 = vmatprep.subr.mxu0 0.0
    %106 = vmatpush2.msra.mxu0 0.0
    %107 = vmatprep.subr.mxu0 0.0
    %108 = vmatpush2.msra.mxu0 0.0
    %109 = vmatprep.subr.mxu0 0.0
    %110 = vmatpush2.msra.mxu0 0.0
    %111 = vmatprep.subr.mxu0 0.0
    %112 = vmatpush2.msra.mxu0 0.0
    %113 = vmatprep.subr.mxu0 0.0
    %114 = vmatpush2.msra.mxu0 0.0
    %115 = vmatprep.subr.mxu0 0.0
    %116 = vmatpush2.msra.mxu0 0.0
    %117 = vmatprep.subr.mxu0 0.0
    %118 = vmatpush2.msra.mxu0 0.0
    %119 = vmatprep.subr.mxu0 0.0
    %120 = vmatpush2.msra.mxu0 0.0
    %121 = vmatprep.mubr.f32.mxu0 0.0
    %122 = vmatmul.mubr.f32.gmra.mxu0 %v52
    %v123 = vpop.f32.mrf.mxu0
    %v124 = vadd.f32 0.0, %v123
    %v125 = vpop.f32.mrf.mxu0
    %v126 = vadd.f32 0.0, %v125
    %127 = vmatprep.mubr.f32.mxu0 0.0
    %128 = vmatmul.mubr.f32.gmra.mxu0 %v55
    %v129 = vpop.f32.mrf.mxu0
    %v130 = vadd.f32 0.0, %v129
    %v131 = vpop.f32.mrf.mxu0
    %v132 = vadd.f32 0.0, %v131
    %133 = vdwg.mxu0
    %134 = vst [vmem:[#allocation7] sm:$0xff] %v124
    %135 = vst.msk [vmem:[#allocation7 + $0x8] sm:$0xff] %vm50, %v126
    %136 = vst [vmem:[#allocation7 + $0x10] sm:$0xff] %v130
    %137 = vst.msk [vmem:[#allocation7 + $0x18] sm:$0xff] %vm50, %v132
    // Predicated region
    $region18: #{gpt4ehr_head_forward.1} parent=1 // pred_check
      _
    $region19: #{gpt4ehr_head_forward.1} parent=1 // pred_check_branch
      %139 = sbr.rel (0) target = $region21
    $region20: #{gpt4ehr_head_forward.1} parent=1 // pred_region
      %s141 = ssub.s32 512, 512
      %142 = vsyncadd [#allocation4], %s141
      %s143 = sshll.u32 [#allocation7], 4
      %s144 = int_to_ptr.vmem [resolvable:$true] %s143
      %149 = dma.vmem_to_hbm [thread:$0]  %s144, 512, %s2, [#allocation4], 256, 256, 16
    $region21: #{gpt4ehr_head_forward.1} parent=1 // pred_fallthru
      _
    // Predicated region
    $region22: #{gpt4ehr_head_forward.1} parent=1 // pred_check
      _
    $region23: #{gpt4ehr_head_forward.1} parent=1 // pred_check_branch
      %151 = sbr.rel (0) target = $region25
    $region24: #{gpt4ehr_head_forward.1} parent=1 // pred_region
      %152 = dma.done [#allocation4], 512
    $region25: #{gpt4ehr_head_forward.1} parent=1 // pred_fallthru
      _
    %153 = vsyncpa [#allocation3], 1
    %154 = vsyncpa [#allocation6], 1
    %155 = vsyncpa [#allocation4], 1

</llo_original>
